<compile_context>
chip_gen: v6e
topology: v6e:2x2x1
jax: 0.10.0
libtpu: 0.0.40
codegen_flags: <defaults>
</compile_context>

<pallas_src>
import functools
import math

import jax
import jax.numpy as jnp
from jax.experimental import pallas as pl
from jax.experimental.pallas import tpu as pltpu


def _round_up(x, m):
    return ((x + m - 1) // m) * m


def _upsample_conv_kernel(x_ref, w_ref, b_ref, o_ref, *, n_groups, lane_grp):
    """One (image, row-tile) step of the polyphase (pre-pixel-shuffle) conv.

    x_ref : (1, n_groups, tile_qh, slab)  tap/width-stacked input operand
    w_ref : (slab, lane_grp)              shared per-group weight (lane-dense)
    b_ref : (1, lane_grp)                 per-group bias row
    o_ref : (1, tile_qh, n_groups*lane_grp) output tile (dense lanes, x128)
    """
    for g in range(n_groups):
        patch = x_ref[0, g]                                   # (tile_qh, slab)
        acc = jax.lax.dot_general(                            # one MXU op per group
            patch, w_ref[...],
            dimension_numbers=(((1,), (0,)), ((), ())),
            preferred_element_type=jnp.float32)               # (tile_qh, lane_grp)
        # register accumulation; single unmasked, 128-aligned lane-slice store
        o_ref[0, :, g * lane_grp:(g + 1) * lane_grp] = (
            acc + b_ref[...]).astype(o_ref.dtype)


def upsample_conv_layer(x_nchw, weight, bias, stride, *, tile_qh=None):
    """ConvTranspose2d forward (PyTorch semantics, padding=0, output_padding=0).

    x_nchw: (N, Cin, H, W)
    weight: (Cin, Cout, KH, KW)  -- PyTorch ConvTranspose2d weight layout
    bias:   (Cout,)
    """
    n, cin, h, w = x_nchw.shape
    cin_w, cout, kh, kw = weight.shape
    assert cin == cin_w and kh == kw, "square kernels only"
    k = kh
    s = int(stride)

    ho = (h - 1) * s + k
    wo = (w - 1) * s + k

    # Polyphase parameters: stride-s ConvTranspose == stride-1 conv with TxT
    # taps producing s*s*Cout channels, then pixel shuffle + crop.
    T = -(-k // s)                       # taps per phase = ceil(K/s)
    kz = s * T
    c_full = s * s * cout                # pre-shuffle channel count (16 here)

    qh = h + T - 1                       # pre-shuffle spatial sizes
    qw = w + T - 1

    # Width-group size: each group of wg output columns occupies exactly
    # lane_grp = lcm(c_full, 128) lanes -> stores are always 128-aligned.
    wg = 128 // math.gcd(c_full, 128)
    lane_grp = wg * c_full
    qw_pad = _round_up(qw, wg)
    n_g = qw_pad // wg
    slab = (wg + T - 1) * T * cin        # contraction dim per group (72 here)

    # Height tiling (no halo needed: taps are pre-stacked into the operand).
    if tile_qh is None:
        tile_qh = min(_round_up(qh, 8), 128)
    qh_pad = _round_up(qh, tile_qh)
    n_h = qh_pad // tile_qh

    hp = qh_pad + T - 1
    wp = qw_pad + T - 1

    # ---- wrapper layout prep (plain XLA on the small original-sized x) ----
    x_nhwc = jnp.transpose(x_nchw, (0, 2, 3, 1))
    x_pad = jnp.pad(x_nhwc, ((0, 0),
                             (T - 1, hp - h - (T - 1)),
                             (T - 1, wp - w - (T - 1)),
                             (0, 0)))
    # Tap-stack along height: x2[n, i, wu, th, ci] = x_pad[n, i+th, wu, ci]
    x2 = jnp.stack([x_pad[:, th:th + qh_pad] for th in range(T)], axis=3)
    # Width groups (wg output columns need wg+T-1 input columns):
    x3 = jnp.stack([x2[:, :, g * wg:g * wg + wg + T - 1] for g in range(n_g)],
                   axis=1)
    x3 = x3.reshape(n, n_g, qh_pad, slab)

    # Polyphase weight wten[th, tw, ci, j], j = ph*s*cout + pw*cout + co
    wz = jnp.zeros((cin, cout, kz, kz), weight.dtype).at[:, :, :k, :k].set(weight)
    wz = wz.reshape(cin, cout, T, s, T, s)
    wz = jnp.flip(wz, axis=(2, 4))
    wten = jnp.transpose(wz, (2, 4, 0, 3, 5, 1)).reshape(T, T, cin, c_full)

    # Shared per-group weight: rows (du, th, ci), cols (dw, j);
    # Wg[(du,th,ci),(dw,j)] = wten[th, du-dw, ci, j] for 0 <= du-dw < T.
    wgrp = jnp.zeros((wg + T - 1, T, cin, wg, c_full), weight.dtype)
    for dw in range(wg):
        for tw in range(T):
            wgrp = wgrp.at[dw + tw, :, :, dw, :].set(wten[:, tw, :, :])
    wgrp = wgrp.reshape(slab, lane_grp)

    bias_grp = jnp.tile(jnp.tile(bias, s * s), wg).reshape(1, lane_grp)

    kernel = functools.partial(_upsample_conv_kernel,
                               n_groups=n_g, lane_grp=lane_grp)

    conv_out = pl.pallas_call(
        kernel,
        out_shape=jax.ShapeDtypeStruct((n, qh_pad, qw_pad * c_full),
                                       x_nchw.dtype),
        grid_spec=pltpu.PrefetchScalarGridSpec(
            num_scalar_prefetch=0,
            grid=(n, n_h),
            in_specs=[
                pl.BlockSpec((1, n_g, tile_qh, slab),
                             lambda i, j: (i, 0, j, 0)),
                # weight & bias: constant block index -> resident across grid
                pl.BlockSpec((slab, lane_grp), lambda i, j: (0, 0)),
                pl.BlockSpec((1, lane_grp), lambda i, j: (0, 0)),
            ],
            out_specs=pl.BlockSpec((1, tile_qh, qw_pad * c_full),
                                   lambda i, j: (i, j, 0)),
        ),
        compiler_params=pltpu.CompilerParams(
            dimension_semantics=("parallel", "parallel")),
    )(x3, wgrp, bias_grp)

    # Pixel shuffle (depth -> space) + crop + back to NCHW (dense output read).
    q = conv_out[:, :qh, :].reshape(n, qh, qw_pad, s, s, cout)[:, :, :qw]
    y = jnp.transpose(q, (0, 1, 3, 2, 4, 5)).reshape(n, qh * s, qw * s, cout)
    y = y[:, :ho, :wo, :]
    return jnp.transpose(y, (0, 3, 1, 2))


def _reference_conv_transpose(x, weight, bias, stride):
    """Pure-JAX reference (scatter-add form) for correctness checking."""
    n, cin, h, w = x.shape
    _, cout, kh, kw = weight.shape
    s = stride
    ho, wo = (h - 1) * s + kh, (w - 1) * s + kw
    out = jnp.zeros((n, cout, ho, wo), jnp.float32)
    for ih in range(kh):
        for iw in range(kw):
            contrib = jnp.einsum('nihw,io->nohw', x.astype(jnp.float32),
                                 weight[:, :, ih, iw].astype(jnp.float32))
            out = out.at[:, :,
                         ih:ih + (h - 1) * s + 1:s,
                         iw:iw + (w - 1) * s + 1:s].add(contrib)
    return out + bias.astype(jnp.float32)[None, :, None, None]


if __name__ == "__main__":
    # Module config (small, consistent with UpsampleConvLayer.__init__):
    in_channels, out_channels, kernel_size, stride = 4, 4, 3, 2
    N, H, W = 2, 16, 16

    key = jax.random.PRNGKey(0)
    kx, kw_, kb = jax.random.split(key, 3)

    x = jax.random.normal(kx, (N, in_channels, H, W), dtype=jnp.float32)
    # PyTorch ConvTranspose2d weight shape: (in_channels, out_channels, KH, KW)
    weight = jax.random.normal(
        kw_, (in_channels, out_channels, kernel_size, kernel_size),
        dtype=jnp.float32) * 0.1
    bias = jax.random.normal(kb, (out_channels,), dtype=jnp.float32) * 0.1

    fwd = jax.jit(lambda a, b, c: upsample_conv_layer(a, b, c, stride))
    out = jax.block_until_ready(fwd(x, weight, bias))

    ref = _reference_conv_transpose(x, weight, bias, stride)
    assert out.shape == (N, out_channels, (H - 1) * stride + kernel_size,
                         (W - 1) * stride + kernel_size), out.shape
    assert jnp.allclose(out, ref, atol=1e-4, rtol=1e-4), \
        float(jnp.max(jnp.abs(out - ref)))

    print("KERNEL_OK")
</pallas_src>

<mosaic_0001>
module attributes {stable_mosaic.version = 11 : i64} {
  func.func @_upsample_conv_kernel(%arg0: i32, %arg1: i32, %arg2: memref<1x3x24x72xf32, #tpu.memory_space<vmem>>, %arg3: memref<72x128xf32, #tpu.memory_space<vmem>>, %arg4: memref<1x128xf32, #tpu.memory_space<vmem>>, %arg5: memref<1x24x384xf32, #tpu.memory_space<vmem>>) attributes {dimension_semantics = [#tpu.dimension_semantics<parallel>, #tpu.dimension_semantics<parallel>], iteration_bounds = array<i64: 2, 1>, scalar_prefetch = 0 : i64, scratch_operands = 0 : i64, tpu.core_type = #tpu.core_type<tc>, window_params = [{transform_indices = @transform_0, window_bounds = array<i64: 1, 3, 24, 72>}, {pipeline_mode = #tpu.pipeline_mode<synchronous>, transform_indices = @transform_1, window_bounds = array<i64: 72, 128>}, {pipeline_mode = #tpu.pipeline_mode<synchronous>, transform_indices = @transform_2, window_bounds = array<i64: 1, 128>}, {transform_indices = @transform_3, window_bounds = array<i64: 1, 24, 384>}]} {
    %c0 = arith.constant 0 : index
    %c0_0 = arith.constant 0 : index
    %c0_1 = arith.constant 0 : index
    %c0_2 = arith.constant 0 : index
    %0 = vector.load %arg2[%c0, %c0_0, %c0_1, %c0_2] : memref<1x3x24x72xf32, #tpu.memory_space<vmem>>, vector<1x1x24x72xf32>
    %1 = vector.shape_cast %0 : vector<1x1x24x72xf32> to vector<24x72xf32>
    %c0_3 = arith.constant 0 : index
    %c0_4 = arith.constant 0 : index
    %2 = vector.load %arg3[%c0_3, %c0_4] : memref<72x128xf32, #tpu.memory_space<vmem>>, vector<72x128xf32>
    %cst = arith.constant dense<0.000000e+00> : vector<24x128xf32>
    %3 = tpu.matmul %1, %2, %cst {dimension_numbers = #tpu.dot_dimension_numbers<[1], [0], [0], [1], [0, 0, 1, 1], [], []>} : vector<24x72xf32>, vector<72x128xf32>, vector<24x128xf32> -> vector<24x128xf32>
    %c0_5 = arith.constant 0 : index
    %c0_6 = arith.constant 0 : index
    %4 = vector.load %arg4[%c0_5, %c0_6] : memref<1x128xf32, #tpu.memory_space<vmem>>, vector<1x128xf32>
    %5 = vector.broadcast %4 : vector<1x128xf32> to vector<24x128xf32>
    %6 = arith.addf %3, %5 : vector<24x128xf32>
    %c0_7 = arith.constant 0 : index
    %c0_8 = arith.constant 0 : index
    %c0_9 = arith.constant 0 : index
    %7 = vector.load %arg5[%c0_7, %c0_8, %c0_9] : memref<1x24x384xf32, #tpu.memory_space<vmem>>, vector<1x24x128xf32>
    %8 = vector.shape_cast %7 : vector<1x24x128xf32> to vector<24x128xf32>
    %9 = vector.shape_cast %6 : vector<24x128xf32> to vector<1x24x128xf32>
    tpu.vector_store %arg5[%c0_7, %c0_8, %c0_9], %9 {strides = array<i32>} : memref<1x24x384xf32, #tpu.memory_space<vmem>>, vector<1x24x128xf32>,
    %c0_10 = arith.constant 0 : index
    %c1 = arith.constant 1 : index
    %c0_11 = arith.constant 0 : index
    %c0_12 = arith.constant 0 : index
    %10 = vector.load %arg2[%c0_10, %c1, %c0_11, %c0_12] : memref<1x3x24x72xf32, #tpu.memory_space<vmem>>, vector<1x1x24x72xf32>
    %11 = vector.shape_cast %10 : vector<1x1x24x72xf32> to vector<24x72xf32>
    %c0_13 = arith.constant 0 : index
    %c0_14 = arith.constant 0 : index
    %12 = vector.load %arg3[%c0_13, %c0_14] : memref<72x128xf32, #tpu.memory_space<vmem>>, vector<72x128xf32>
    %cst_15 = arith.constant dense<0.000000e+00> : vector<24x128xf32>
    %13 = tpu.matmul %11, %12, %cst_15 {dimension_numbers = #tpu.dot_dimension_numbers<[1], [0], [0], [1], [0, 0, 1, 1], [], []>} : vector<24x72xf32>, vector<72x128xf32>, vector<24x128xf32> -> vector<24x128xf32>
    %c0_16 = arith.constant 0 : index
    %c0_17 = arith.constant 0 : index
    %14 = vector.load %arg4[%c0_16, %c0_17] : memref<1x128xf32, #tpu.memory_space<vmem>>, vector<1x128xf32>
    %15 = vector.broadcast %14 : vector<1x128xf32> to vector<24x128xf32>
    %16 = arith.addf %13, %15 : vector<24x128xf32>
    %c0_18 = arith.constant 0 : index
    %c0_19 = arith.constant 0 : index
    %c128 = arith.constant 128 : index
    %17 = vector.load %arg5[%c0_18, %c0_19, %c128] : memref<1x24x384xf32, #tpu.memory_space<vmem>>, vector<1x24x128xf32>
    %18 = vector.shape_cast %17 : vector<1x24x128xf32> to vector<24x128xf32>
    %19 = vector.shape_cast %16 : vector<24x128xf32> to vector<1x24x128xf32>
    tpu.vector_store %arg5[%c0_18, %c0_19, %c128], %19 {strides = array<i32>} : memref<1x24x384xf32, #tpu.memory_space<vmem>>, vector<1x24x128xf32>,
    %c0_20 = arith.constant 0 : index
    %c2 = arith.constant 2 : index
    %c0_21 = arith.constant 0 : index
    %c0_22 = arith.constant 0 : index
    %20 = vector.load %arg2[%c0_20, %c2, %c0_21, %c0_22] : memref<1x3x24x72xf32, #tpu.memory_space<vmem>>, vector<1x1x24x72xf32>
    %21 = vector.shape_cast %20 : vector<1x1x24x72xf32> to vector<24x72xf32>
    %c0_23 = arith.constant 0 : index
    %c0_24 = arith.constant 0 : index
    %22 = vector.load %arg3[%c0_23, %c0_24] : memref<72x128xf32, #tpu.memory_space<vmem>>, vector<72x128xf32>
    %cst_25 = arith.constant dense<0.000000e+00> : vector<24x128xf32>
    %23 = tpu.matmul %21, %22, %cst_25 {dimension_numbers = #tpu.dot_dimension_numbers<[1], [0], [0], [1], [0, 0, 1, 1], [], []>} : vector<24x72xf32>, vector<72x128xf32>, vector<24x128xf32> -> vector<24x128xf32>
    %c0_26 = arith.constant 0 : index
    %c0_27 = arith.constant 0 : index
    %24 = vector.load %arg4[%c0_26, %c0_27] : memref<1x128xf32, #tpu.memory_space<vmem>>, vector<1x128xf32>
    %25 = vector.broadcast %24 : vector<1x128xf32> to vector<24x128xf32>
    %26 = arith.addf %23, %25 : vector<24x128xf32>
    %c0_28 = arith.constant 0 : index
    %c0_29 = arith.constant 0 : index
    %c256 = arith.constant 256 : index
    %27 = vector.load %arg5[%c0_28, %c0_29, %c256] : memref<1x24x384xf32, #tpu.memory_space<vmem>>, vector<1x24x128xf32>
    %28 = vector.shape_cast %27 : vector<1x24x128xf32> to vector<24x128xf32>
    %29 = vector.shape_cast %26 : vector<24x128xf32> to vector<1x24x128xf32>
    tpu.vector_store %arg5[%c0_28, %c0_29, %c256], %29 {strides = array<i32>} : memref<1x24x384xf32, #tpu.memory_space<vmem>>, vector<1x24x128xf32>,
    return
  }
  func.func @transform_0(%arg0: i32, %arg1: i32) -> (i32, i32, i32, i32) {
    %c0_i32 = arith.constant 0 : i32
    %c0_i32_0 = arith.constant 0 : i32
    %c0_i32_1 = arith.constant 0 : i32
    return %arg0, %c0_i32, %arg1, %c0_i32_0 : i32, i32, i32, i32
  }
  func.func @transform_1(%arg0: i32, %arg1: i32) -> (i32, i32) {
    %c0_i32 = arith.constant 0 : i32
    %c0_i32_0 = arith.constant 0 : i32
    %c0_i32_1 = arith.constant 0 : i32
    return %c0_i32, %c0_i32_0 : i32, i32
  }
  func.func @transform_2(%arg0: i32, %arg1: i32) -> (i32, i32) {
    %c0_i32 = arith.constant 0 : i32
    %c0_i32_0 = arith.constant 0 : i32
    %c0_i32_1 = arith.constant 0 : i32
    return %c0_i32, %c0_i32_0 : i32, i32
  }
  func.func @transform_3(%arg0: i32, %arg1: i32) -> (i32, i32, i32) {
    %c0_i32 = arith.constant 0 : i32
    %c0_i32_0 = arith.constant 0 : i32
    return %arg0, %arg1, %c0_i32 : i32, i32, i32
  }
}

</mosaic_0001>

<llo_original>
// kernel: tile.15
$region0: #{tile.15}
  %s0 = inlined_call_operand.vmem [shape: f32[4,4], index: 0, kind: input, shape index: {}]
  %s1 = inlined_call_operand.vmem [shape: f32[16], index: 1, kind: output, shape index: {}]
  $region1: #{tile.15} parent=0
    #allocation0 [shape = 'u8[4096]{0}', space=vmem, size = 0x1000, scoped, tag = 'scoped mem for output reshape']
    #allocation1 [shape = 'u8[4096]{0}', space=vmem, size = 0x1000, scoped, tag = 'scoped mem for input reshape']
    %s3 = sshll.u32 1, 4
    %s4 = ssub.s32 %s3, 1
    %v5 = vld [vmem:[%s0] sm:%s4]
    %6 = vst [vmem:[#allocation1] sm:%s4] %v5
    %v7 = vld [vmem:[#allocation1] sm:$0x1]
    %vm8 = vcmask 31744
    %9 = vst.msk [vmem:[#allocation0] sm:$0x1] %vm8, %v7
    %s10 = scalar_lea.vmem [#allocation1], 3
    %v11 = vld [vmem:[%s10] sm:$0x1]
    %12 = vrot.lane.b32.xlu0 %v11, 12
    %v13 = vpop.permute.xlu0 %12
    %vm14 = vcmask 130144
    %15 = vst.msk [vmem:[#allocation0] sm:$0x1] %vm14, %v13
    %s16 = scalar_lea.vmem [#allocation1], 2
    %v17 = vld [vmem:[%s16] sm:$0x1]
    %18 = vrot.lane.b32.xlu0 %v17, 8
    %v19 = vpop.permute.xlu0 %18
    %vm20 = vcmask 97344
    %21 = vst.msk [vmem:[#allocation0] sm:$0x1] %vm20, %v19
    %s22 = scalar_lea.vmem [#allocation1], 1
    %v23 = vld [vmem:[%s22] sm:$0x1]
    %24 = vrot.lane.b32.xlu0 %v23, 4
    %v25 = vpop.permute.xlu0 %24
    %vm26 = vcmask 64544
    %27 = vst.msk [vmem:[#allocation0] sm:$0x1] %vm26, %v25
    %s29 = sshll.u32 1, 1
    %s30 = ssub.s32 %s29, 1
    %v32 = vld [vmem:[#allocation0] sm:%s30]
    %s33 = sshll.u32 1, 1
    %s34 = ssub.s32 %s33, 1
    %35 = vst [vmem:[%s1] sm:%s34] %v32

// kernel: tile.17
$region0: #{tile.17}
  %s0 = inlined_call_operand.vmem [shape: f32[8,16], index: 0, kind: input, shape index: {}]
  %s1 = inlined_call_operand.vmem [shape: f32[1,128], index: 1, kind: output, shape index: {}]
  $region1: #{tile.17} parent=0
    #allocation0 [shape = 'u8[4096]{0}', space=vmem, size = 0x1000, scoped, tag = 'scoped mem for output reshape']
    %v2 = vld [vmem:[%s0] sm:$0x1]
    %vm3 = vcmask 130048
    %4 = vst.msk [vmem:[#allocation0] sm:$0x1] %vm3, %v2
    %s5 = scalar_lea.vmem %s0, 7
    %v6 = vld [vmem:[%s5] sm:$0x1]
    %7 = vrot.lane.b32.xlu0 %v6, 112
    %v8 = vpop.permute.xlu0 %7
    %vm9 = vcmask 1048448
    %10 = vst.msk [vmem:[#allocation0] sm:$0x1] %vm9, %v8
    %s11 = scalar_lea.vmem %s0, 6
    %v12 = vld [vmem:[%s11] sm:$0x1]
    %13 = vrot.lane.b32.xlu0 %v12, 96
    %v14 = vpop.permute.xlu0 %13
    %vm15 = vcmask 917248
    %16 = vst.msk [vmem:[#allocation0] sm:$0x1] %vm15, %v14
    %s17 = scalar_lea.vmem %s0, 5
    %v18 = vld [vmem:[%s17] sm:$0x1]
    %19 = vrot.lane.b32.xlu0 %v18, 80
    %v20 = vpop.permute.xlu0 %19
    %vm21 = vcmask 786048
    %22 = vst.msk [vmem:[#allocation0] sm:$0x1] %vm21, %v20
    %s23 = scalar_lea.vmem %s0, 4
    %v24 = vld [vmem:[%s23] sm:$0x1]
    %25 = vrot.lane.b32.xlu0 %v24, 64
    %v26 = vpop.permute.xlu0 %25
    %vm27 = vcmask 654848
    %28 = vst.msk [vmem:[#allocation0] sm:$0x1] %vm27, %v26
    %s29 = scalar_lea.vmem %s0, 3
    %v30 = vld [vmem:[%s29] sm:$0x1]
    %31 = vrot.lane.b32.xlu0 %v30, 48
    %v32 = vpop.permute.xlu0 %31
    %vm33 = vcmask 523648
    %34 = vst.msk [vmem:[#allocation0] sm:$0x1] %vm33, %v32
    %s35 = scalar_lea.vmem %s0, 2
    %v36 = vld [vmem:[%s35] sm:$0x1]
    %37 = vrot.lane.b32.xlu0 %v36, 32
    %v38 = vpop.permute.xlu0 %37
    %vm39 = vcmask 392448
    %40 = vst.msk [vmem:[#allocation0] sm:$0x1] %vm39, %v38
    %s41 = scalar_lea.vmem %s0, 1
    %v42 = vld [vmem:[%s41] sm:$0x1]
    %43 = vrot.lane.b32.xlu0 %v42, 16
    %v44 = vpop.permute.xlu0 %43
    %vm45 = vcmask 261248
    %46 = vst.msk [vmem:[#allocation0] sm:$0x1] %vm45, %v44
    %s48 = sshll.u32 1, 1
    %s49 = ssub.s32 %s48, 1
    %v51 = vld [vmem:[#allocation0] sm:%s49]
    %s52 = sshll.u32 1, 1
    %s53 = ssub.s32 %s52, 1
    %54 = vst [vmem:[%s1] sm:%s53] %v51

// kernel: tile.16
$region0: #{tile.16}
  #allocation0 [shape = 's32[1]{0}', space=sflag, size = 0x4, scoped, tag = 'scoped memory for tile.16']
  %s0 = inlined_call_operand.vmem [shape: f32[16], index: 0, kind: input, shape index: {}]
  %s1 = inlined_call_operand.vmem [shape: f32[8,16], index: 1, kind: output, shape index: {}]
  // Predicated region
  $region2: #{tile.16} parent=0 // pred_check
    _
  $region3: #{tile.16} parent=0 // pred_check_branch
    %3 = sbr.rel (0) target = $region5
  $region4: #{tile.16} parent=0 // pred_region
    _
  $region5: #{tile.16} parent=0 // pred_fallthru
    _
  %v4 = vld [vmem:[%s0] ss:$0 sm:$0xff]
  %5 = vst [vmem:[%s1] sm:$0xff] %v4

// kernel: tile.12
$region0: #{tile.12}
  #allocation2 [shape = 's32[1]{0}', space=sflag, size = 0x4, scoped, tag = 'scoped memory for tile.12']
  %s0 = inlined_call_operand.hbm [shape: f32[4], index: 0, kind: input, shape index: {}]
  %s1 = inlined_call_operand.vmem [shape: f32[4,4], index: 1, kind: output, shape index: {}]
  $region1: #{tile.12} parent=0
    #allocation0 [shape = 'u8[512]{0}', space=vmem, size = 0x400, scoped, tag = 'operand span for operand 0']
    #allocation1 [shape = 's32[1]{0}', space=sflag, size = 0x4, scoped, tag = 'scoped memory for tile.12']
    %2 = vsyncpa [#allocation1], 0
    // Predicated region
    $region2: #{tile.12} parent=1 // pred_check
      _
    $region3: #{tile.12} parent=1 // pred_check_branch
      %4 = sbr.rel (0) target = $region5
    $region4: #{tile.12} parent=1 // pred_region
      %s6 = ssub.s32 16, 16
      %7 = vsyncadd [#allocation1], %s6
      %s9 = sshll.u32 [#allocation0], 4
      %s10 = int_to_ptr.vmem [resolvable:$true] %s9
      %12 = dma.hbm_to_vmem [thread:$0]  %s0, 16, %s10, [#allocation1]
    $region5: #{tile.12} parent=1 // pred_fallthru
      _
    // Predicated region
    $region6: #{tile.12} parent=1 // pred_check
      _
    $region7: #{tile.12} parent=1 // pred_check_branch
      %14 = sbr.rel (0) target = $region9
    $region8: #{tile.12} parent=1 // pred_region
      %15 = dma.done [#allocation1], 16
    $region9: #{tile.12} parent=1 // pred_fallthru
      _
    %v16 = vld [vmem:[#allocation0] ss:$0 sm:$0xff]
    %17 = vst [vmem:[%s1] sm:$0xf] %v16
    %18 = vsyncpa [#allocation1], 1

// kernel: _lambda_.1
$region0: #{_lambda_.1}
  #allocation0 [shape = 'u32[]', space=smem, size = 0x4, offset = 0x4, fixed_abs, tag = 'smem constant byte address 0x4 - core index']
  #allocation1 [shape = 'u32[144,128]{1,0:T(1,128)}', space=vmem, size = 0x12000, scoped, tag = 'internal scratch']
  %s0 = inlined_call_operand.vmem [shape: f32[2,3,24,72], index: 0, kind: input, shape index: {}]
  %s1 = inlined_call_operand.vmem [shape: f32[72,128], index: 1, kind: input, shape index: {}]
  %s2 = inlined_call_operand.vmem [shape: f32[1,128], index: 2, kind: input, shape index: {}]
  %s3 = inlined_call_operand.vmem [shape: f32[2,24,384], index: 3, kind: output, shape index: {}]
  %s4 = sld [smem:[#allocation0]]
  $region45: #{_lambda_.1} parent=0
    _
  %s6 = ssub.s32 1, %s4
  %s7 = scalar_select 0, %s6, %s4
  loop: start=0, step=1, limit=4
  $region2: #{_lambda_.1} parent=0 // loop_pre_header
    _
  $region3: #{_lambda_.1} parent=0 // loop_header
    %s9 = sphi 0, %s13
    %p10 = scmp.ge.s32.totalorder %s9, 4
    %s16 = sphi 0, %s28
    %s17 = sphi 0, %s24
    %s18 = sphi 0, %s16
    %s19 = sphi 0, %s17
    %s20 = sphi 0, %s18
    %s21 = sphi 0, %s19
    %s33 = sphi 0, %s35
    %s36 = sphi 0, %s33
    %s37 = sphi 0, %s36
    %s53 = sphi 0, %s37
    %s57 = sphi 0, %s57
    %s59 = sphi 0, %s57
    %s60 = sphi 0, %s59
    %s74 = sphi 0, %s60
    %s78 = sphi 0, %s78
    %s80 = sphi 0, %s78
    %s81 = sphi 0, %s80
    %s95 = sphi 0, %s81
    %s103 = sphi 0, %s105
    %s106 = sphi 0, %s103
    %s107 = sphi 0, %s106
    %s123 = sphi 0, %s107
  $region4: #{_lambda_.1} parent=0 // loop_header_branch
    %12 = sbr.rel (%p10) target = $region8
  $region5: #{_lambda_.1} parent=0 // loop_body
    %s14 = ssub.s32 %s9, 1
    %s15 = ssub.s32 %s9, 2
    %s22 = sadd.s32 1, %s17
    %p23 = scmp.ge.s32.totalorder %s22, 1
    %s24 = scalar_select %p23, 0, %s22
    %s25 = sadd.s32 1, %s16
    %s26 = scalar_select %p23, %s25, %s16
    %p27 = scmp.ge.s32.totalorder %s26, 2
    %s28 = scalar_select %p27, 0, %s26
    %s29 = ssub.s32 %s16, %s28
    %s30 = ssub.s32 %s17, %s24
    %s31 = sor.u32 %s29, %s30
    %p32 = scmp.eq.s32.totalorder %s31, 0
    %s34 = sadd.s32 %s33, 1
    %s35 = scalar_select %p32, %s33, %s34
    %p38 = pneg %p32
    %p39 = scmp.eq.s32.totalorder %s9, 1
    %p40 = por %p38, %p39
    %p41 = scmp.ne.s32.totalorder %s33, %s36
    %p42 = scmp.eq.s32.totalorder %s9, 0
    %p43 = por %p41, %p42
    %p44 = scmp.ne.s32.totalorder %s33, %s36
    %p45 = scmp.eq.s32.totalorder %s14, 1
    %p46 = por %p44, %p45
    %p47 = scmp.ne.s32.totalorder %s36, %s37
    %p48 = scmp.eq.s32.totalorder %s14, 0
    %p49 = por %p47, %p48
    %p50 = scmp.ne.s32.totalorder %s36, %s37
    %p51 = scmp.eq.s32.totalorder %s15, 1
    %p52 = por %p50, %p51
    %p54 = scmp.ne.s32.totalorder %s37, %s53
    %p55 = scmp.eq.s32.totalorder %s15, 0
    %p56 = por %p54, %p55
    %s58 = sadd.s32 %s57, 1
    %p61 = scmp.eq.s32.totalorder %s9, 1
    %p62 = scmp.ne.s32.totalorder %s57, %s59
    %p63 = scmp.eq.s32.totalorder %s9, 0
    %p64 = por %p62, %p63
    %p65 = scmp.ne.s32.totalorder %s57, %s59
    %p66 = scmp.eq.s32.totalorder %s14, 1
    %p67 = por %p65, %p66
    %p68 = scmp.ne.s32.totalorder %s59, %s60
    %p69 = scmp.eq.s32.totalorder %s14, 0
    %p70 = por %p68, %p69
    %p71 = scmp.ne.s32.totalorder %s59, %s60
    %p72 = scmp.eq.s32.totalorder %s15, 1
    %p73 = por %p71, %p72
    %p75 = scmp.ne.s32.totalorder %s60, %s74
    %p76 = scmp.eq.s32.totalorder %s15, 0
    %p77 = por %p75, %p76
    %s79 = sadd.s32 %s78, 1
    %p82 = scmp.eq.s32.totalorder %s9, 1
    %p83 = scmp.ne.s32.totalorder %s78, %s80
    %p84 = scmp.eq.s32.totalorder %s9, 0
    %p85 = por %p83, %p84
    %p86 = scmp.ne.s32.totalorder %s78, %s80
    %p87 = scmp.eq.s32.totalorder %s14, 1
    %p88 = por %p86, %p87
    %p89 = scmp.ne.s32.totalorder %s80, %s81
    %p90 = scmp.eq.s32.totalorder %s14, 0
    %p91 = por %p89, %p90
    %p92 = scmp.ne.s32.totalorder %s80, %s81
    %p93 = scmp.eq.s32.totalorder %s15, 1
    %p94 = por %p92, %p93
    %p96 = scmp.ne.s32.totalorder %s81, %s95
    %p97 = scmp.eq.s32.totalorder %s15, 0
    %p98 = por %p96, %p97
    %s99 = ssub.s32 %s16, %s28
    %s100 = ssub.s32 %s17, %s24
    %s101 = sor.u32 %s99, %s100
    %p102 = scmp.eq.s32.totalorder %s101, 0
    %s104 = sadd.s32 %s103, 1
    %s105 = scalar_select %p102, %s103, %s104
    %p108 = pneg %p102
    %p109 = scmp.eq.s32.totalorder %s9, 1
    %p110 = por %p108, %p109
    %p111 = scmp.ne.s32.totalorder %s103, %s106
    %p112 = scmp.eq.s32.totalorder %s9, 0
    %p113 = por %p111, %p112
    %p114 = scmp.ne.s32.totalorder %s103, %s106
    %p115 = scmp.eq.s32.totalorder %s14, 1
    %p116 = por %p114, %p115
    %p117 = scmp.ne.s32.totalorder %s106, %s107
    %p118 = scmp.eq.s32.totalorder %s14, 0
    %p119 = por %p117, %p118
    %p120 = scmp.ne.s32.totalorder %s106, %s107
    %p121 = scmp.eq.s32.totalorder %s15, 1
    %p122 = por %p120, %p121
    %p124 = scmp.ne.s32.totalorder %s107, %s123
    %p125 = scmp.eq.s32.totalorder %s15, 0
    %p126 = por %p124, %p125
    %p127 = scmp.le.s32.totalorder 1, %s9
    %p128 = scmp.lt.s32.totalorder %s9, 3
    %p129 = pnand %p127, %p128
    %p130 = pneg %p129
    // Predicated region
    $region9: #{_lambda_.1} parent=5 // pred_check
      _
    $region10: #{_lambda_.1} parent=5 // pred_check_branch
      %132 = sbr.rel (%p129) target = $region12
    $region11: #{_lambda_.1} parent=5 // pred_region
      %s133 = ssub.s32 %s9, 1
      // Predicated region
      $region13: #{_lambda_.1} parent=11 // pred_check
        %p134 = pneg %p70
      $region14: #{_lambda_.1} parent=11 // pred_check_branch
        %136 = sbr.rel (%p134) target = $region16
      $region15: #{_lambda_.1} parent=11 // pred_region
        _
      $region16: #{_lambda_.1} parent=11 // pred_fallthru
        _
      // Predicated region
      $region17: #{_lambda_.1} parent=11 // pred_check
        %p137 = pneg %p91
      $region18: #{_lambda_.1} parent=11 // pred_check_branch
        %139 = sbr.rel (%p137) target = $region20
      $region19: #{_lambda_.1} parent=11 // pred_region
        _
      $region20: #{_lambda_.1} parent=11 // pred_fallthru
        _
    $region12: #{_lambda_.1} parent=5 // pred_fallthru
      _
    %p140 = scmp.lt.s32.totalorder %s9, 2
    // Predicated region
    $region21: #{_lambda_.1} parent=5 // pred_check
      %p141 = pneg %p140
    $region22: #{_lambda_.1} parent=5 // pred_check_branch
      %143 = sbr.rel (%p141) target = $region24
    $region23: #{_lambda_.1} parent=5 // pred_region
      // Predicated region
      $region25: #{_lambda_.1} parent=23 // pred_check
        %p144 = pneg %p43
      $region26: #{_lambda_.1} parent=23 // pred_check_branch
        %146 = sbr.rel (%p144) target = $region28
      $region27: #{_lambda_.1} parent=23 // pred_region
        %s147 = smul.u32 3, %s17
        %p148 = scmp.lt.s32.totalorder %s16, 1
        %s149 = scalar_select %p148, %s16, 1
        %p150 = scmp.lt.s32.totalorder %s147, 2
        %s151 = scalar_select %p150, %s147, 2
        %s152 = smul.addr %s149, 9
        %s153 = sadd.s32 %s151, %s152
        %s154 = smul.addr %s153, 8
        %s155 = scalar_lea.vmem %s0, %s154
        %s156 = smul.u32 3, %s17
      $region28: #{_lambda_.1} parent=23 // pred_fallthru
        _
    $region24: #{_lambda_.1} parent=5 // pred_fallthru
      _
    %p157 = scmp.le.s32.totalorder 1, %s9
    %p158 = scmp.lt.s32.totalorder %s9, 3
    %p159 = pnand %p157, %p158
    %p160 = pneg %p159
    // Predicated region
    $region29: #{_lambda_.1} parent=5 // pred_check
      _
    $region30: #{_lambda_.1} parent=5 // pred_check_branch
      %162 = sbr.rel (%p159) target = $region32
    $region31: #{_lambda_.1} parent=5 // pred_region
      %s163 = ssub.s32 %s9, 1
      %s164 = smul.u32 3, %s19
      %p165 = scmp.lt.s32.totalorder %s18, 1
      %s166 = scalar_select %p165, %s18, 1
      %p167 = scmp.lt.s32.totalorder %s164, 2
      %s168 = scalar_select %p167, %s164, 2
      %s169 = smul.addr %s166, 9
      %s170 = sadd.s32 %s168, %s169
      %s171 = smul.addr %s170, 8
      %s172 = scalar_lea.vmem %s0, %s171
      %p173 = pneg %p49
      %p174 = pneg %p46
      %p175 = pneg %p70
      %p176 = pneg %p67
      %p177 = pneg %p91
      %p178 = pneg %p88
      %p179 = pneg %p119
      %p180 = pneg %p116
      %s181 = smul.u32 3, %s19
      %p182 = scmp.lt.s32.totalorder %s18, 1
      %s183 = scalar_select %p182, %s18, 1
      %p184 = scmp.lt.s32.totalorder %s181, 2
      %s185 = scalar_select %p184, %s181, 2
      %s186 = smul.addr %s185, 3
      %s187 = smul.addr %s183, 9
      %s188 = sadd.s32 %s186, %s187
      %s189 = smul.addr %s188, 8
      %s190 = scalar_lea.vmem %s3, %s189
      %s191 = smul.u32 3, %s19
      %p192 = scmp.lt.s32.totalorder %s18, 1
      %s193 = scalar_select %p192, %s18, 1
      %p194 = scmp.lt.s32.totalorder %s191, 2
      %s195 = scalar_select %p194, %s191, 2
      %s196 = smul.addr %s193, 9
      %s197 = sadd.s32 %s195, %s196
      %s198 = smul.addr %s197, 8
      %s199 = scalar_lea.vmem %s0, %s198
      %s200 = smul.u32 3, %s19
      %s201 = smul.u32 3, %s19
      %p202 = scmp.lt.s32.totalorder %s18, 1
      %s203 = scalar_select %p202, %s18, 1
      %p204 = scmp.lt.s32.totalorder %s201, 2
      %s205 = scalar_select %p204, %s201, 2
      %s206 = smul.addr %s205, 3
      %s207 = smul.addr %s203, 9
      %s208 = sadd.s32 %s206, %s207
      %s209 = smul.addr %s208, 8
      %s210 = scalar_lea.vmem %s3, %s209
      %s211 = smul.u32 3, %s19
      %v212 = vld [vmem:[%s199] sm:$0xff]
      %v213 = vld [vmem:[%s199 + $0x8] sm:$0xff]
      %v214 = vld [vmem:[%s199 + $0x10] sm:$0xff]
      %v215 = vld [vmem:[%s1] sm:$0xff]
      %v216 = vld [vmem:[%s1 + $0x8] sm:$0xff]
      %v217 = vld [vmem:[%s1 + $0x10] sm:$0xff]
      %v218 = vld [vmem:[%s1 + $0x18] sm:$0xff]
      %v219 = vld [vmem:[%s1 + $0x20] sm:$0xff]
      %v220 = vld [vmem:[%s1 + $0x28] sm:$0xff]
      %v221 = vld [vmem:[%s1 + $0x30] sm:$0xff]
      %v222 = vld [vmem:[%s1 + $0x38] sm:$0xff]
      %v223 = vld [vmem:[%s1 + $0x40] sm:$0xff]
      %v224 = vld [vmem:[%s2] sm:$0x1]
      %v226 = vlaneseq
      %v227 = vshrl.u32 %v226, 7
      %v228 = vsub.s32 0, %v227
      %v229 = vrot.slane %v224, %v228
      %vm231 = vcmask 588800
      %v233 = vsel %vm231, %v212, 0
      %v236 = vsel %vm231, %v213, 0
      %v239 = vsel %vm231, %v214, 0
      %241 = vmatprep.subr.mxu0 0.0
      %242 = vmatpush1.msra.mxu0 0.0
      %243 = vmatprep.subr.mxu0 0.0
      %244 = vmatpush1.msra.mxu0 0.0
      %245 = vmatprep.subr.mxu0 0.0
      %246 = vmatpush1.msra.mxu0 0.0
      %247 = vmatprep.subr.mxu0 0.0
      %248 = vmatpush1.msra.mxu0 0.0
      %249 = vmatprep.subr.mxu0 0.0
      %250 = vmatpush1.msra.mxu0 0.0
      %251 = vmatprep.subr.mxu0 0.0
      %252 = vmatpush1.msra.mxu0 0.0
      %253 = vmatprep.subr.mxu0 0.0
      %254 = vmatpush1.msra.mxu0 0.0
      %255 = vmatprep.subr.mxu0 0.0
      %256 = vmatpush1.msra.mxu0 %v223
      %257 = vmatprep.subr.mxu0 0.0
      %258 = vmatpush1.msra.mxu0 %v222
      %259 = vmatprep.subr.mxu0 0.0
      %260 = vmatpush1.msra.mxu0 %v221
      %261 = vmatprep.subr.mxu0 0.0
      %262 = vmatpush1.msra.mxu0 %v220
      %263 = vmatprep.subr.mxu0 0.0
      %264 = vmatpush1.msra.mxu0 %v219
      %265 = vmatprep.subr.mxu0 0.0
      %266 = vmatpush1.msra.mxu0 %v218
      %267 = vmatprep.subr.mxu0 0.0
      %268 = vmatpush1.msra.mxu0 %v217
      %269 = vmatprep.subr.mxu0 0.0
      %270 = vmatpush1.msra.mxu0 %v216
      %271 = vmatprep.subr.mxu0 0.0
      %272 = vmatpush1.msra.mxu0 %v215
      %273 = vmatprep.subr.mxu0 0.0
      %274 = vmatpush2.msra.mxu0 0.0
      %275 = vmatprep.subr.mxu0 0.0
      %276 = vmatpush2.msra.mxu0 0.0
      %277 = vmatprep.subr.mxu0 0.0
      %278 = vmatpush2.msra.mxu0 0.0
      %279 = vmatprep.subr.mxu0 0.0
      %280 = vmatpush2.msra.mxu0 0.0
      %281 = vmatprep.subr.mxu0 0.0
      %282 = vmatpush2.msra.mxu0 0.0
      %283 = vmatprep.subr.mxu0 0.0
      %284 = vmatpush2.msra.mxu0 0.0
      %285 = vmatprep.subr.mxu0 0.0
      %286 = vmatpush2.msra.mxu0 0.0
      %287 = vmatprep.subr.mxu0 0.0
      %288 = vmatpush2.msra.mxu0 0.0
      %289 = vmatprep.subr.mxu0 0.0
      %290 = vmatpush2.msra.mxu0 0.0
      %291 = vmatprep.subr.mxu0 0.0
      %292 = vmatpush2.msra.mxu0 0.0
      %293 = vmatprep.subr.mxu0 0.0
      %294 = vmatpush2.msra.mxu0 0.0
      %295 = vmatprep.subr.mxu0 0.0
      %296 = vmatpush2.msra.mxu0 0.0
      %297 = vmatprep.subr.mxu0 0.0
      %298 = vmatpush2.msra.mxu0 0.0
      %299 = vmatprep.subr.mxu0 0.0
      %300 = vmatpush2.msra.mxu0 0.0
      %301 = vmatprep.subr.mxu0 0.0
      %302 = vmatpush2.msra.mxu0 0.0
      %303 = vmatprep.subr.mxu0 0.0
      %304 = vmatpush2.msra.mxu0 0.0
      %305 = vmatprep.mubr.f32.mxu0 0.0
      %306 = vmatmul.mubr.f32.gmra.mxu0 %v233
      %v307 = vpop.f32.mrf.mxu0
      %v308 = vadd.f32 %v229, %v307
      %v309 = vpop.f32.mrf.mxu0
      %310 = vmatprep.mubr.f32.mxu0 0.0
      %311 = vmatmul.mubr.f32.gmra.mxu0 %v236
      %v312 = vpop.f32.mrf.mxu0
      %v313 = vadd.f32 %v229, %v312
      %v314 = vpop.f32.mrf.mxu0
      %315 = vmatprep.mubr.f32.mxu0 0.0
      %316 = vmatmul.mubr.f32.gmra.mxu0 %v239
      %v317 = vpop.f32.mrf.mxu0
      %v318 = vadd.f32 %v229, %v317
      %v319 = vpop.f32.mrf.mxu0
      %320 = vdwg.mxu0
      %321 = vst [vmem:[%s210] sm:$0xff] %v308
      %322 = vst [vmem:[%s210 + $0x18] sm:$0xff] %v313
      %323 = vst [vmem:[%s210 + $0x30] sm:$0xff] %v318
      %s324 = scalar_lea.vmem %s199, 24
      %v325 = vld [vmem:[%s324] sm:$0xff]
      %v326 = vld [vmem:[%s324 + $0x8] sm:$0xff]
      %v327 = vld [vmem:[%s324 + $0x10] sm:$0xff]
      %v328 = vld [vmem:[%s1] sm:$0xff]
      %v329 = vld [vmem:[%s1 + $0x8] sm:$0xff]
      %v330 = vld [vmem:[%s1 + $0x10] sm:$0xff]
      %v331 = vld [vmem:[%s1 + $0x18] sm:$0xff]
      %v332 = vld [vmem:[%s1 + $0x20] sm:$0xff]
      %v333 = vld [vmem:[%s1 + $0x28] sm:$0xff]
      %v334 = vld [vmem:[%s1 + $0x30] sm:$0xff]
      %v335 = vld [vmem:[%s1 + $0x38] sm:$0xff]
      %v336 = vld [vmem:[%s1 + $0x40] sm:$0xff]
      %v337 = vld [vmem:[%s2] sm:$0x1]
      %v339 = vlaneseq
      %v340 = vshrl.u32 %v339, 7
      %v341 = vsub.s32 0, %v340
      %v342 = vrot.slane %v337, %v341
      %v345 = vsel %vm231, %v325, 0
      %v348 = vsel %vm231, %v326, 0
      %v351 = vsel %vm231, %v327, 0
      %353 = vmatprep.subr.mxu0 0.0
      %354 = vmatpush1.msra.mxu0 0.0
      %355 = vmatprep.subr.mxu0 0.0
      %356 = vmatpush1.msra.mxu0 0.0
      %357 = vmatprep.subr.mxu0 0.0
      %358 = vmatpush1.msra.mxu0 0.0
      %359 = vmatprep.subr.mxu0 0.0
      %360 = vmatpush1.msra.mxu0 0.0
      %361 = vmatprep.subr.mxu0 0.0
      %362 = vmatpush1.msra.mxu0 0.0
      %363 = vmatprep.subr.mxu0 0.0
      %364 = vmatpush1.msra.mxu0 0.0
      %365 = vmatprep.subr.mxu0 0.0
      %366 = vmatpush1.msra.mxu0 0.0
      %367 = vmatprep.subr.mxu0 0.0
      %368 = vmatpush1.msra.mxu0 %v336
      %369 = vmatprep.subr.mxu0 0.0
      %370 = vmatpush1.msra.mxu0 %v335
      %371 = vmatprep.subr.mxu0 0.0
      %372 = vmatpush1.msra.mxu0 %v334
      %373 = vmatprep.subr.mxu0 0.0
      %374 = vmatpush1.msra.mxu0 %v333
      %375 = vmatprep.subr.mxu0 0.0
      %376 = vmatpush1.msra.mxu0 %v332
      %377 = vmatprep.subr.mxu0 0.0
      %378 = vmatpush1.msra.mxu0 %v331
      %379 = vmatprep.subr.mxu0 0.0
      %380 = vmatpush1.msra.mxu0 %v330
      %381 = vmatprep.subr.mxu0 0.0
      %382 = vmatpush1.msra.mxu0 %v329
      %383 = vmatprep.subr.mxu0 0.0
      %384 = vmatpush1.msra.mxu0 %v328
      %385 = vmatprep.subr.mxu0 0.0
      %386 = vmatpush2.msra.mxu0 0.0
      %387 = vmatprep.subr.mxu0 0.0
      %388 = vmatpush2.msra.mxu0 0.0
      %389 = vmatprep.subr.mxu0 0.0
      %390 = vmatpush2.msra.mxu0 0.0
      %391 = vmatprep.subr.mxu0 0.0
      %392 = vmatpush2.msra.mxu0 0.0
      %393 = vmatprep.subr.mxu0 0.0
      %394 = vmatpush2.msra.mxu0 0.0
      %395 = vmatprep.subr.mxu0 0.0
      %396 = vmatpush2.msra.mxu0 0.0
      %397 = vmatprep.subr.mxu0 0.0
      %398 = vmatpush2.msra.mxu0 0.0
      %399 = vmatprep.subr.mxu0 0.0
      %400 = vmatpush2.msra.mxu0 0.0
      %401 = vmatprep.subr.mxu0 0.0
      %402 = vmatpush2.msra.mxu0 0.0
      %403 = vmatprep.subr.mxu0 0.0
      %404 = vmatpush2.msra.mxu0 0.0
      %405 = vmatprep.subr.mxu0 0.0
      %406 = vmatpush2.msra.mxu0 0.0
      %407 = vmatprep.subr.mxu0 0.0
      %408 = vmatpush2.msra.mxu0 0.0
      %409 = vmatprep.subr.mxu0 0.0
      %410 = vmatpush2.msra.mxu0 0.0
      %411 = vmatprep.subr.mxu0 0.0
      %412 = vmatpush2.msra.mxu0 0.0
      %413 = vmatprep.subr.mxu0 0.0
      %414 = vmatpush2.msra.mxu0 0.0
      %415 = vmatprep.subr.mxu0 0.0
      %416 = vmatpush2.msra.mxu0 0.0
      %417 = vmatprep.mubr.f32.mxu0 0.0
      %418 = vmatmul.mubr.f32.gmra.mxu0 %v345
      %v419 = vpop.f32.mrf.mxu0
      %v420 = vadd.f32 %v342, %v419
      %v421 = vpop.f32.mrf.mxu0
      %422 = vmatprep.mubr.f32.mxu0 0.0
      %423 = vmatmul.mubr.f32.gmra.mxu0 %v348
      %v424 = vpop.f32.mrf.mxu0
      %v425 = vadd.f32 %v342, %v424
      %v426 = vpop.f32.mrf.mxu0
      %427 = vmatprep.mubr.f32.mxu0 0.0
      %428 = vmatmul.mubr.f32.gmra.mxu0 %v351
      %v429 = vpop.f32.mrf.mxu0
      %v430 = vadd.f32 %v342, %v429
      %v431 = vpop.f32.mrf.mxu0
      %432 = vdwg.mxu0
      %433 = vst [vmem:[%s210 + $0x8] sm:$0xff] %v420
      %434 = vst [vmem:[%s210 + $0x20] sm:$0xff] %v425
      %435 = vst [vmem:[%s210 + $0x38] sm:$0xff] %v430
      %s436 = scalar_lea.vmem %s199, 48
      %v437 = vld [vmem:[%s436] sm:$0xff]
      %v438 = vld [vmem:[%s436 + $0x8] sm:$0xff]
      %v439 = vld [vmem:[%s436 + $0x10] sm:$0xff]
      %v440 = vld [vmem:[%s1] sm:$0xff]
      %v441 = vld [vmem:[%s1 + $0x8] sm:$0xff]
      %v442 = vld [vmem:[%s1 + $0x10] sm:$0xff]
      %v443 = vld [vmem:[%s1 + $0x18] sm:$0xff]
      %v444 = vld [vmem:[%s1 + $0x20] sm:$0xff]
      %v445 = vld [vmem:[%s1 + $0x28] sm:$0xff]
      %v446 = vld [vmem:[%s1 + $0x30] sm:$0xff]
      %v447 = vld [vmem:[%s1 + $0x38] sm:$0xff]
      %v448 = vld [vmem:[%s1 + $0x40] sm:$0xff]
      %v449 = vld [vmem:[%s2] sm:$0x1]
      %v451 = vlaneseq
      %v452 = vshrl.u32 %v451, 7
      %v453 = vsub.s32 0, %v452
      %v454 = vrot.slane %v449, %v453
      %v457 = vsel %vm231, %v437, 0
      %v460 = vsel %vm231, %v438, 0
      %v463 = vsel %vm231, %v439, 0
      %465 = vmatprep.subr.mxu0 0.0
      %466 = vmatpush1.msra.mxu0 0.0
      %467 = vmatprep.subr.mxu0 0.0
      %468 = vmatpush1.msra.mxu0 0.0
      %469 = vmatprep.subr.mxu0 0.0
      %470 = vmatpush1.msra.mxu0 0.0
      %471 = vmatprep.subr.mxu0 0.0
      %472 = vmatpush1.msra.mxu0 0.0
      %473 = vmatprep.subr.mxu0 0.0
      %474 = vmatpush1.msra.mxu0 0.0
      %475 = vmatprep.subr.mxu0 0.0
      %476 = vmatpush1.msra.mxu0 0.0
      %477 = vmatprep.subr.mxu0 0.0
      %478 = vmatpush1.msra.mxu0 0.0
      %479 = vmatprep.subr.mxu0 0.0
      %480 = vmatpush1.msra.mxu0 %v448
      %481 = vmatprep.subr.mxu0 0.0
      %482 = vmatpush1.msra.mxu0 %v447
      %483 = vmatprep.subr.mxu0 0.0
      %484 = vmatpush1.msra.mxu0 %v446
      %485 = vmatprep.subr.mxu0 0.0
      %486 = vmatpush1.msra.mxu0 %v445
      %487 = vmatprep.subr.mxu0 0.0
      %488 = vmatpush1.msra.mxu0 %v444
      %489 = vmatprep.subr.mxu0 0.0
      %490 = vmatpush1.msra.mxu0 %v443
      %491 = vmatprep.subr.mxu0 0.0
      %492 = vmatpush1.msra.mxu0 %v442
      %493 = vmatprep.subr.mxu0 0.0
      %494 = vmatpush1.msra.mxu0 %v441
      %495 = vmatprep.subr.mxu0 0.0
      %496 = vmatpush1.msra.mxu0 %v440
      %497 = vmatprep.subr.mxu0 0.0
      %498 = vmatpush2.msra.mxu0 0.0
      %499 = vmatprep.subr.mxu0 0.0
      %500 = vmatpush2.msra.mxu0 0.0
      %501 = vmatprep.subr.mxu0 0.0
      %502 = vmatpush2.msra.mxu0 0.0
      %503 = vmatprep.subr.mxu0 0.0
      %504 = vmatpush2.msra.mxu0 0.0
      %505 = vmatprep.subr.mxu0 0.0
      %506 = vmatpush2.msra.mxu0 0.0
      %507 = vmatprep.subr.mxu0 0.0
      %508 = vmatpush2.msra.mxu0 0.0
      %509 = vmatprep.subr.mxu0 0.0
      %510 = vmatpush2.msra.mxu0 0.0
      %511 = vmatprep.subr.mxu0 0.0
      %512 = vmatpush2.msra.mxu0 0.0
      %513 = vmatprep.subr.mxu0 0.0
      %514 = vmatpush2.msra.mxu0 0.0
      %515 = vmatprep.subr.mxu0 0.0
      %516 = vmatpush2.msra.mxu0 0.0
      %517 = vmatprep.subr.mxu0 0.0
      %518 = vmatpush2.msra.mxu0 0.0
      %519 = vmatprep.subr.mxu0 0.0
      %520 = vmatpush2.msra.mxu0 0.0
      %521 = vmatprep.subr.mxu0 0.0
      %522 = vmatpush2.msra.mxu0 0.0
      %523 = vmatprep.subr.mxu0 0.0
      %524 = vmatpush2.msra.mxu0 0.0
      %525 = vmatprep.subr.mxu0 0.0
      %526 = vmatpush2.msra.mxu0 0.0
      %527 = vmatprep.subr.mxu0 0.0
      %528 = vmatpush2.msra.mxu0 0.0
      %529 = vmatprep.mubr.f32.mxu0 0.0
      %530 = vmatmul.mubr.f32.gmra.mxu0 %v457
      %v531 = vpop.f32.mrf.mxu0
      %v532 = vadd.f32 %v454, %v531
      %v533 = vpop.f32.mrf.mxu0
      %534 = vmatprep.mubr.f32.mxu0 0.0
      %535 = vmatmul.mubr.f32.gmra.mxu0 %v460
      %v536 = vpop.f32.mrf.mxu0
      %v537 = vadd.f32 %v454, %v536
      %v538 = vpop.f32.mrf.mxu0
      %539 = vmatprep.mubr.f32.mxu0 0.0
      %540 = vmatmul.mubr.f32.gmra.mxu0 %v463
      %v541 = vpop.f32.mrf.mxu0
      %v542 = vadd.f32 %v454, %v541
      %v543 = vpop.f32.mrf.mxu0
      %544 = vdwg.mxu0
      %545 = vst [vmem:[%s210 + $0x10] sm:$0xff] %v532
      %546 = vst [vmem:[%s210 + $0x28] sm:$0xff] %v537
      %547 = vst [vmem:[%s210 + $0x40] sm:$0xff] %v542
      %s548 = smul.u32 3, %s19
      %p549 = scmp.lt.s32.totalorder %s18, 1
      %s550 = scalar_select %p549, %s18, 1
      %p551 = scmp.lt.s32.totalorder %s548, 2
      %s552 = scalar_select %p551, %s548, 2
      %s553 = smul.addr %s552, 3
      %s554 = smul.addr %s550, 9
      %s555 = sadd.s32 %s553, %s554
      %s556 = smul.addr %s555, 8
      %s557 = scalar_lea.vmem %s3, %s556
      // Predicated region
      $region33: #{_lambda_.1} parent=31 // pred_check
        %p558 = pneg %p116
      $region34: #{_lambda_.1} parent=31 // pred_check_branch
        %560 = sbr.rel (%p558) target = $region36
      $region35: #{_lambda_.1} parent=31 // pred_region
        %s561 = smul.u32 3, %s19
      $region36: #{_lambda_.1} parent=31 // pred_fallthru
        _
    $region32: #{_lambda_.1} parent=5 // pred_fallthru
      _
    %p562 = scmp.le.s32.totalorder 2, %s9
    // Predicated region
    $region37: #{_lambda_.1} parent=5 // pred_check
      %p563 = pneg %p562
    $region38: #{_lambda_.1} parent=5 // pred_check_branch
      %565 = sbr.rel (%p563) target = $region40
    $region39: #{_lambda_.1} parent=5 // pred_region
      %s566 = ssub.s32 %s9, 2
      // Predicated region
      $region41: #{_lambda_.1} parent=39 // pred_check
        %p567 = pneg %p122
      $region42: #{_lambda_.1} parent=39 // pred_check_branch
        %569 = sbr.rel (%p567) target = $region44
      $region43: #{_lambda_.1} parent=39 // pred_region
        %s570 = smul.u32 3, %s21
        %p571 = scmp.lt.s32.totalorder %s20, 1
        %s572 = scalar_select %p571, %s20, 1
        %p573 = scmp.lt.s32.totalorder %s570, 2
        %s574 = scalar_select %p573, %s570, 2
        %s575 = smul.addr %s574, 3
        %s576 = smul.addr %s572, 9
        %s577 = sadd.s32 %s575, %s576
        %s578 = smul.addr %s577, 8
        %s579 = scalar_lea.vmem %s3, %s578
      $region44: #{_lambda_.1} parent=39 // pred_fallthru
        _
    $region40: #{_lambda_.1} parent=5 // pred_fallthru
      _
  $region6: #{_lambda_.1} parent=0 // loop_footer
    %s13 = sadd.s32 1, %s9
  $region7: #{_lambda_.1} parent=0 // loop_footer_branch
    %8 = sbr.rel target = $region3
  $region8: #{_lambda_.1} parent=0 // loop_exit
    _

</llo_original>
